<compile_context>
chip_gen: v6e
topology: v6e:2x2x1
jax: 0.10.0
libtpu: 0.0.40
codegen_flags: <defaults>
</compile_context>

<pallas_src>
import math
import functools

import jax
import jax.numpy as jnp
from jax.experimental import pallas as pl
from jax.experimental.pallas import tpu as pltpu


def _build_pe(d_model: int, max_len: int) -> jnp.ndarray:
    """Precompute the sinusoidal positional-encoding buffer (glue, plain JAX)."""
    position = jnp.arange(0, max_len, dtype=jnp.float32)[:, None]            # (L, 1)
    div_term = jnp.exp(
        jnp.arange(0, d_model, 2, dtype=jnp.float32) * (-math.log(10000.0) / d_model)
    )                                                                         # (D/2,)
    pe = jnp.zeros((max_len, d_model), dtype=jnp.float32)
    pe = pe.at[:, 0::2].set(jnp.sin(position * div_term))
    pe = pe.at[:, 1::2].set(jnp.cos(position * div_term))
    return pe[None, :, :]                                                     # (1, L, D)


# --------------------------------------------------------------------------- kernels


def _pe_add_kernel(x_ref, pe_ref, o_ref):
    # x_ref: (TB, TN), pe_ref: (1, TN) broadcast over the batch-tile rows.
    o_ref[...] = (x_ref[...] + pe_ref[...]).astype(o_ref.dtype)


def _pe_add_dropout_kernel(x_ref, pe_ref, bits_ref, o_ref, *, threshold, scale):
    # Integer-threshold dropout: keep iff bits < (1 - p) * 2^32 (unsigned compare),
    # then one fused select with the precomputed 1/(1-p) scale.
    y = x_ref[...].astype(jnp.float32) + pe_ref[...]
    keep = bits_ref[...] < jnp.uint32(threshold)
    o_ref[...] = jnp.where(keep, y * scale, 0.0).astype(o_ref.dtype)


# --------------------------------------------------------------------------- tiling


def _choose_tiles(B: int, N: int, max_block_elems: int):
    """Pick (batch_tile, flat_tile) satisfying the (8,128) / full-dim rule."""
    if B <= 8:
        tb = B                      # full dim -> always legal
    elif B % 8 == 0:
        tb = 8                      # sublane-aligned batch tile
    else:
        tb = B                      # fall back to full batch (legal, just big)

    cap = max(128, max_block_elems // tb)
    if N <= cap:
        return tb, N                # single lane-dense block along the flat axis
    # Largest multiple of 128 that divides N and fits the per-block budget.
    t = (cap // 128) * 128
    while t >= 128:
        if N % t == 0:
            return tb, t
        t -= 128
    return tb, N                    # no clean 128-multiple divisor; use the full row


# --------------------------------------------------------------------------- wrapper


def positional_encoding(x, pe, *, dropout_p=0.1, training=False, rng_key=None,
                        max_block_elems=256 * 1024):
    """x: (B, S, D); pe: (1, max_len, D) float32.  Returns (B, S, D) in x.dtype."""
    B, S, D = x.shape
    N = S * D

    # Lane-dense flat layout: last dim is S*D (contiguous reshape, free).
    x2 = x.reshape(B, N)
    pe2 = pe[:, :S, :].reshape(1, N).astype(jnp.float32)

    tb, tn = _choose_tiles(B, N, max_block_elems)
    grid = (B // tb if B % tb == 0 else pl.cdiv(B, tb), N // tn)

    x_spec = pl.BlockSpec((tb, tn), lambda i, j: (i, j))
    pe_spec = pl.BlockSpec((1, tn), lambda i, j: (0, j))     # shared across batch tiles
    out_spec = pl.BlockSpec((tb, tn), lambda i, j: (i, j))

    apply_dropout = training and dropout_p > 0.0
    if apply_dropout:
        if rng_key is None:
            rng_key = jax.random.PRNGKey(0)
        bits = jax.random.bits(rng_key, (B, N), dtype=jnp.uint32)
        threshold = min(int(round((1.0 - dropout_p) * 4294967296.0)), 4294967295)
        scale = 1.0 / (1.0 - dropout_p)
        kernel = functools.partial(_pe_add_dropout_kernel,
                                   threshold=threshold, scale=scale)
        in_specs = [x_spec, pe_spec, pl.BlockSpec((tb, tn), lambda i, j: (i, j))]
        args = (x2, pe2, bits)
    else:
        kernel = _pe_add_kernel
        in_specs = [x_spec, pe_spec]
        args = (x2, pe2)

    out2 = pl.pallas_call(
        kernel,
        out_shape=jax.ShapeDtypeStruct((B, N), x.dtype),
        grid=grid,
        in_specs=in_specs,
        out_specs=out_spec,
        compiler_params=pltpu.CompilerParams(
            dimension_semantics=("parallel", "parallel")),
    )(*args)
    return out2.reshape(B, S, D)


# --------------------------------------------------------------------------- test


if __name__ == "__main__":
    B, S, D = 2, 8, 32
    MAX_LEN = 1024
    DROPOUT_P = 0.1

    key = jax.random.PRNGKey(0)
    k_x, k_drop = jax.random.split(key)
    x = jax.random.normal(k_x, (B, S, D), dtype=jnp.float32)
    pe = _build_pe(D, MAX_LEN)
    ref = x + pe[:, :S, :]

    # Eval mode (dropout = identity): deterministic, check against reference.
    out_eval = jax.block_until_ready(
        positional_encoding(x, pe, dropout_p=DROPOUT_P, training=False))
    assert out_eval.shape == (B, S, D)
    assert jnp.allclose(out_eval, ref, atol=1e-5, rtol=1e-5), "eval-mode mismatch"

    # Eval mode with forced small blocks: exercises the multi-block tiled path
    # (grid over the flat axis + pe broadcast across batch tiles).
    out_tiled = jax.block_until_ready(
        positional_encoding(x, pe, dropout_p=DROPOUT_P, training=False,
                            max_block_elems=256))
    assert jnp.allclose(out_tiled, ref, atol=1e-5, rtol=1e-5), "tiled-path mismatch"

    # Train mode: every output element must be either 0 (dropped) or the
    # reference value scaled by 1/(1-p) (kept).  Exact mask need not match torch RNG.
    out_train = jax.block_until_ready(
        positional_encoding(x, pe, dropout_p=DROPOUT_P, training=True, rng_key=k_drop))
    assert out_train.shape == (B, S, D)
    ref_scaled = ref / (1.0 - DROPOUT_P)
    ok = jnp.logical_or(jnp.isclose(out_train, 0.0, atol=1e-6),
                        jnp.isclose(out_train, ref_scaled, atol=1e-5, rtol=1e-5))
    assert bool(jnp.all(ok)), "train-mode dropout values inconsistent"

    print("KERNEL_OK")
</pallas_src>

<mosaic_0001>
module attributes {stable_mosaic.version = 11 : i64} {
  func.func @_pe_add_kernel(%arg0: i32, %arg1: i32, %arg2: memref<2x256xf32, #tpu.memory_space<vmem>>, %arg3: memref<1x256xf32, #tpu.memory_space<vmem>>, %arg4: memref<2x256xf32, #tpu.memory_space<vmem>>) attributes {dimension_semantics = [#tpu.dimension_semantics<parallel>, #tpu.dimension_semantics<parallel>], iteration_bounds = array<i64: 1, 1>, scalar_prefetch = 0 : i64, scratch_operands = 0 : i64, tpu.core_type = #tpu.core_type<tc>, window_params = [{transform_indices = @transform_0, window_bounds = array<i64: 2, 256>}, {transform_indices = @transform_1, window_bounds = array<i64: 1, 256>}, {transform_indices = @transform_2, window_bounds = array<i64: 2, 256>}]} {
    %c0 = arith.constant 0 : index
    %c0_0 = arith.constant 0 : index
    %0 = vector.load %arg2[%c0, %c0_0] : memref<2x256xf32, #tpu.memory_space<vmem>>, vector<2x256xf32>
    %c0_1 = arith.constant 0 : index
    %c0_2 = arith.constant 0 : index
    %1 = vector.load %arg3[%c0_1, %c0_2] : memref<1x256xf32, #tpu.memory_space<vmem>>, vector<1x256xf32>
    %2 = vector.broadcast %1 : vector<1x256xf32> to vector<2x256xf32>
    %3 = arith.addf %0, %2 : vector<2x256xf32>
    %c0_3 = arith.constant 0 : index
    %c0_4 = arith.constant 0 : index
    %4 = vector.load %arg4[%c0_3, %c0_4] : memref<2x256xf32, #tpu.memory_space<vmem>>, vector<2x256xf32>
    tpu.vector_store %arg4[%c0_3, %c0_4], %3 {strides = array<i32>} : memref<2x256xf32, #tpu.memory_space<vmem>>, vector<2x256xf32>,
    return
  }
  func.func @transform_0(%arg0: i32, %arg1: i32) -> (i32, i32) {
    %c0_i32 = arith.constant 0 : i32
    return %arg0, %arg1 : i32, i32
  }
  func.func @transform_1(%arg0: i32, %arg1: i32) -> (i32, i32) {
    %c0_i32 = arith.constant 0 : i32
    %c0_i32_0 = arith.constant 0 : i32
    return %c0_i32, %arg1 : i32, i32
  }
  func.func @transform_2(%arg0: i32, %arg1: i32) -> (i32, i32) {
    %c0_i32 = arith.constant 0 : i32
    return %arg0, %arg1 : i32, i32
  }
}

</mosaic_0001>

<llo_original>
// kernel: tpu_custom_call.1
$region0: #{tpu_custom_call.1}
  #allocation0 [shape = 'u32[]', space=smem, size = 0x4, offset = 0x4, fixed_abs, tag = 'smem constant byte address 0x4 - core index']
  #allocation1 [shape = 'u32[144,128]{1,0:T(1,128)}', space=vmem, size = 0x12000, scoped, tag = 'internal scratch']
  %s0 = inlined_call_operand.hbm [shape: f32[2,256], index: 0, kind: input, shape index: {}]
  %s1 = inlined_call_operand.hbm [shape: f32[1,256], index: 1, kind: input, shape index: {}]
  %s2 = inlined_call_operand.hbm [shape: f32[2,256], index: 2, kind: output, shape index: {}]
  %s3 = sld [smem:[#allocation0]]
  $region26: #{tpu_custom_call.1} parent=0
    _
  %s5 = ssub.s32 1, %s3
  %s6 = scalar_select 0, %s5, %s3
  $region1: #{tpu_custom_call.1} parent=0
    #allocation2 [shape = 'u8[2048]{0}', space=vmem, size = 0x800, scoped, tag = 'input window, operand 0, single buffered']
    #allocation3 [shape = 's32[1]{0}', space=sflag, size = 0x4, scoped, tag = 'scoped memory for tpu_custom_call.1']
    #allocation4 [shape = 's32[1]{0}', space=sflag, size = 0x4, scoped, tag = 'scoped memory for tpu_custom_call.1']
    #allocation5 [shape = 'u8[1024]{0}', space=vmem, size = 0x400, scoped, tag = 'input window, operand 1, single buffered']
    #allocation6 [shape = 's32[1]{0}', space=sflag, size = 0x4, scoped, tag = 'scoped memory for tpu_custom_call.1']
    #allocation7 [shape = 'u8[2048]{0}', space=vmem, size = 0x800, scoped, tag = 'output window, operand 0, single buffered']
    %7 = vsyncpa [#allocation3], 0
    %8 = vsyncpa [#allocation6], 0
    %9 = vsyncpa [#allocation4], 0
    // Predicated region
    $region2: #{tpu_custom_call.1} parent=1 // pred_check
      _
    $region3: #{tpu_custom_call.1} parent=1 // pred_check_branch
      %11 = sbr.rel (0) target = $region5
    $region4: #{tpu_custom_call.1} parent=1 // pred_region
      %s13 = ssub.s32 64, 64
      %14 = vsyncadd [#allocation3], %s13
      %s16 = sshll.u32 [#allocation2], 4
      %s17 = int_to_ptr.vmem [resolvable:$true] %s16
      %19 = dma.hbm_to_vmem [thread:$0]  %s0, 64, %s17, [#allocation3]
    $region5: #{tpu_custom_call.1} parent=1 // pred_fallthru
      _
    // Predicated region
    $region6: #{tpu_custom_call.1} parent=1 // pred_check
      _
    $region7: #{tpu_custom_call.1} parent=1 // pred_check_branch
      %21 = sbr.rel (0) target = $region9
    $region8: #{tpu_custom_call.1} parent=1 // pred_region
      %s23 = ssub.s32 32, 32
      %24 = vsyncadd [#allocation6], %s23
      %s26 = sshll.u32 [#allocation5], 4
      %s27 = int_to_ptr.vmem [resolvable:$true] %s26
      %29 = dma.hbm_to_vmem [thread:$0]  %s1, 32, %s27, [#allocation6]
    $region9: #{tpu_custom_call.1} parent=1 // pred_fallthru
      _
    // Predicated region
    $region10: #{tpu_custom_call.1} parent=1 // pred_check
      _
    $region11: #{tpu_custom_call.1} parent=1 // pred_check_branch
      %31 = sbr.rel (0) target = $region13
    $region12: #{tpu_custom_call.1} parent=1 // pred_region
      %32 = dma.done [#allocation3], 64
    $region13: #{tpu_custom_call.1} parent=1 // pred_fallthru
      _
    // Predicated region
    $region14: #{tpu_custom_call.1} parent=1 // pred_check
      _
    $region15: #{tpu_custom_call.1} parent=1 // pred_check_branch
      %34 = sbr.rel (0) target = $region17
    $region16: #{tpu_custom_call.1} parent=1 // pred_region
      %35 = dma.done [#allocation6], 32
    $region17: #{tpu_custom_call.1} parent=1 // pred_fallthru
      _
    %v36 = vld [vmem:[#allocation2] sm:$0xf]
    %v37 = vld [vmem:[#allocation5] sm:$0x3]
    %v39 = vlaneseq
    %v40 = vshrl.u32 %v39, 7
    %v41 = vsub.s32 0, %v40
    %v42 = vrot.slane %v37, %v41
    %v43 = vlaneseq
    %v44 = vshrl.u32 %v43, 7
    %v45 = vsub.s32 1, %v44
    %v46 = vrot.slane %v37, %v45
    %v47 = vcombine.low %v42, %v46
    %v49 = vunpack.c.l.s4 1983009808
    %v50 = vunpack.c.0.s8 %v49
    %v51 = vlaneseq
    %v52 = vshrl.u32 %v51, 7
    %v53 = vsub.s32 %v50, %v52
    %v54 = vrot.slane %v47, %v53
    %v56 = vadd.f32 %v36, %v54
    %57 = vst [vmem:[#allocation7] sm:$0xf] %v56
    // Predicated region
    $region18: #{tpu_custom_call.1} parent=1 // pred_check
      _
    $region19: #{tpu_custom_call.1} parent=1 // pred_check_branch
      %59 = sbr.rel (0) target = $region21
    $region20: #{tpu_custom_call.1} parent=1 // pred_region
      %s61 = ssub.s32 64, 64
      %62 = vsyncadd [#allocation4], %s61
      %s64 = sshll.u32 [#allocation7], 4
      %s65 = int_to_ptr.vmem [resolvable:$true] %s64
      %67 = dma.vmem_to_hbm [thread:$0]  %s65, 64, %s2, [#allocation4]
    $region21: #{tpu_custom_call.1} parent=1 // pred_fallthru
      _
    // Predicated region
    $region22: #{tpu_custom_call.1} parent=1 // pred_check
      _
    $region23: #{tpu_custom_call.1} parent=1 // pred_check_branch
      %69 = sbr.rel (0) target = $region25
    $region24: #{tpu_custom_call.1} parent=1 // pred_region
      %70 = dma.done [#allocation4], 64
    $region25: #{tpu_custom_call.1} parent=1 // pred_fallthru
      _
    %71 = vsyncpa [#allocation3], 1
    %72 = vsyncpa [#allocation6], 1
    %73 = vsyncpa [#allocation4], 1

</llo_original>
